<compile_context>
chip_gen: v6e
topology: v6e:2x2x1
jax: 0.10.0
libtpu: 0.0.40
codegen_flags: <defaults>
</compile_context>

<pallas_src>
import functools

import jax
import jax.numpy as jnp
from jax import lax
from jax.experimental import pallas as pl
from jax.experimental.pallas import tpu as pltpu


def _conv_block_kernel(x_ref, wb_ref, hsel_ref, t_ref, g_ref, b_ref, o_ref, *,
                       N, Hc, Wc, Cout, KH, stride, activation, eps):
    """Fused Conv2d + BatchNorm2d(train stats) + MaxPool2d(3,3,2) + activation.

    x_ref    : (N, Hp, Wp*Cin)        padded input, W and Cin folded into lanes (f32)
    wb_ref   : (KH*Wp*Cin, Wc*Cout)   banded conv weight (bf16)
    hsel_ref : (3, N*Ho, N*Hc)        0/1 row-selection matrices for the H pool (f32)
    t_ref    : (Wc*Cout, Wc*Cout)     0/1 same-channel matrix for BN stats (f32)
    g_ref    : (1, Wc*Cout)           BN gamma, tiled over w (f32)
    b_ref    : (1, Wc*Cout)           BN beta, tiled over w (f32)
    o_ref    : (N*Ho, Wc*Cout)        H-pooled, W-window-maxed, activated output
    """
    wp_cin = x_ref.shape[2]
    x = x_ref[...]

    # ---- LHS of the banded row-strip matmul: KH sublane-shifted row copies,
    #      lane-concatenated (KH pieces of width Wp*Cin). ----
    strips = []
    for kh in range(KH):
        if stride == 1:
            strips.append(x[:, kh:kh + Hc, :])
        else:
            # TODO(synk): strided-H conv path (stride > 1) is not exercised by
            # the test shapes below.
            strips.append(lax.slice(
                x, (0, kh, 0), (N, kh + (Hc - 1) * stride + 1, wp_cin),
                (1, stride, 1)))
    lhs = jnp.concatenate(strips, axis=-1).reshape(N * Hc, KH * wp_cin)

    # ---- Conv2d: ONE MXU matmul, bf16 inputs, f32 accumulation.  Output tile is
    #      lane-dense: N*Hc rows x Wc*Cout lanes (128 for the test shape). ----
    conv = jnp.dot(lhs.astype(jnp.bfloat16), wb_ref[...],
                   preferred_element_type=jnp.float32)              # (N*Hc, L)

    # ---- BatchNorm2d (train-mode batch stats) folded into per-lane scale/shift.
    #      T merges the Wc lane groups of the same channel and broadcasts the
    #      result back to every lane on the idle MXU (no lane<->sublane
    #      relayout); the remaining row reduction is a plain sublane sum.
    #      Conv bias omitted: it cancels against the batch mean (train-mode BN
    #      only; reinstate it for eval-mode running stats). ----
    m_rows = N * Hc
    inv_total = 1.0 / float(m_rows * Wc)
    t = t_ref[...]
    ch_sum = jnp.dot(conv, t, preferred_element_type=jnp.float32)        # (N*Hc, L)
    ch_sq = jnp.dot(conv * conv, t, preferred_element_type=jnp.float32)  # (N*Hc, L)
    mean = jnp.sum(ch_sum, axis=0, keepdims=True) * inv_total            # (1, L)
    ex2 = jnp.sum(ch_sq, axis=0, keepdims=True) * inv_total
    # Single-pass E[x^2]-E[x]^2 in f32 is fine at these magnitudes; switch to a
    # two-pass / Welford accumulation when tiling for large inputs.
    var = ex2 - mean * mean
    scale = g_ref[...] * lax.rsqrt(var + eps)                            # (1, L)
    shift = b_ref[...] - mean * scale

    # BN must precede the pool (scale can be negative); activation comes after.
    y = conv * scale + shift                                             # (N*Hc, L)

    # ---- MaxPool H direction (3 rows, stride 2): gather the three row-shifted
    #      operands with tiny 0/1 selection matmuls (sublane gather on the MXU),
    #      then two VPU maxes. ----
    h0 = jnp.dot(hsel_ref[0], y, preferred_element_type=jnp.float32)
    h1 = jnp.dot(hsel_ref[1], y, preferred_element_type=jnp.float32)
    h2 = jnp.dot(hsel_ref[2], y, preferred_element_type=jnp.float32)
    hmax = jnp.maximum(jnp.maximum(h0, h1), h2)                          # (N*Ho, L)

    # ---- MaxPool W direction: the W axis lives in lanes (l = w*Cout + co), so
    #      the 3-wide window max is two static lane shifts + two VPU maxes.  The
    #      result stays lane-dense at every w; the wrapper reads the even-w
    #      groups.  Wrapped lanes (w >= Wc-2) are never read. ----
    s1 = jnp.roll(hmax, -Cout, axis=-1)
    s2 = jnp.roll(hmax, -2 * Cout, axis=-1)
    wmax = jnp.maximum(jnp.maximum(hmax, s1), s2)                        # (N*Ho, L)

    # ---- Activation AFTER the pool (tanh/relu are monotone non-decreasing). ----
    act = jnp.tanh(wmax) if activation == 'tanh' else jnp.maximum(wmax, 0.0)
    o_ref[...] = act.astype(o_ref.dtype)


def conv_block_forward(x_nchw, w_oihw, bias, gamma, beta, *,
                       stride=1, padding=1, activation='tanh', eps=1e-5):
    """ConvBlock forward.  Input/output are NCHW like the PyTorch module.

    `bias` is accepted for API compatibility but unused: a per-channel conv bias
    is cancelled exactly by the train-mode BatchNorm mean subtraction.
    """
    assert activation in ('tanh', 'relu')
    N, Cin, Hin, Win = x_nchw.shape
    Cout, Cin_w, KH, KW = w_oihw.shape
    assert Cin_w == Cin
    del bias  # algebraically cancelled by train-mode BatchNorm

    Hp, Wp = Hin + 2 * padding, Win + 2 * padding
    Hc = (Hp - KH) // stride + 1
    Wc = (Wp - KW) // stride + 1
    Ho = (Hc - 3) // 2 + 1                      # MaxPool2d(3, stride=2), VALID
    Wo = (Wc - 3) // 2 + 1
    L = Wc * Cout

    # NCHW -> NHWC, pad, fold (W, Cin) into lanes: (N, Hp, Wp*Cin).
    x = jnp.transpose(x_nchw, (0, 2, 3, 1)).astype(jnp.float32)
    x = jnp.pad(x, ((0, 0), (padding, padding), (padding, padding), (0, 0)))
    x = x.reshape(N, Hp, Wp * Cin)

    # Banded conv weight: Wb[kh*Wp*Cin + wp*Cin + ci, w*Cout + co]
    #   = W[kh, wp - w*stride, ci, co] inside the band, else 0.
    w_hwio = jnp.transpose(w_oihw, (2, 3, 1, 0)).astype(jnp.float32)  # (KH,KW,Cin,Cout)
    kw_rel = jnp.arange(Wp)[:, None] - jnp.arange(Wc)[None, :] * stride   # (Wp, Wc)
    in_band = (kw_rel >= 0) & (kw_rel < KW)
    wb = w_hwio[:, jnp.clip(kw_rel, 0, KW - 1), :, :]                 # (KH,Wp,Wc,Cin,Cout)
    wb = jnp.where(in_band[None, :, :, None, None], wb, 0.0)
    wb = jnp.transpose(wb, (0, 1, 3, 2, 4)).reshape(KH * Wp * Cin, L)
    wb = wb.astype(jnp.bfloat16)          # native MXU input dtype; f32 accumulation

    # 0/1 helper matrices (pure reduction / gather plumbing, used on the MXU).
    lane = jnp.arange(L)
    t_mat = (lane[:, None] % Cout == lane[None, :] % Cout).astype(jnp.float32)
    rows = jnp.arange(N * Ho)
    src = (rows // Ho) * Hc + (rows % Ho) * 2                         # pool stride 2
    cols = jnp.arange(N * Hc)
    hsel = jnp.stack(
        [(src[:, None] + k == cols[None, :]).astype(jnp.float32) for k in range(3)],
        axis=0)                                                       # (3, N*Ho, N*Hc)

    gamma_t = jnp.tile(gamma.astype(jnp.float32).reshape(1, Cout), (1, Wc))
    beta_t = jnp.tile(beta.astype(jnp.float32).reshape(1, Cout), (1, Wc))

    kernel = functools.partial(
        _conv_block_kernel, N=N, Hc=Hc, Wc=Wc, Cout=Cout, KH=KH, stride=stride,
        activation=activation, eps=eps)

    vmem = pl.BlockSpec(memory_space=pltpu.MemorySpace.VMEM)
    out2d = pl.pallas_call(
        kernel,
        out_shape=jax.ShapeDtypeStruct((N * Ho, L), jnp.float32),
        in_specs=[vmem] * 6,
        out_specs=vmem,
        compiler_params=pltpu.CompilerParams(
            # Far above this kernel's ~0.2 MiB working set and a safe cap on all
            # generations (v7x has 64 MiB physical VMEM); raise toward ~100 MiB
            # on v5e/v6e when a grid with large row/batch tiles is added.
            vmem_limit_bytes=32 * 1024 * 1024),
    )(x, wb, hsel, t_mat, gamma_t, beta_t)

    # Layout-only readout: keep the even-w lane groups and go back to NCHW.
    out = out2d.reshape(N, Ho, Wc, Cout)[:, :, :2 * Wo - 1:2, :]      # (N, Ho, Wo, Cout)
    return jnp.transpose(out, (0, 3, 1, 2)).astype(x_nchw.dtype)      # NCHW


def conv_block_reference(x, w, b, gamma, beta, *, stride, padding, activation,
                         eps=1e-5):
    """Pure-JAX reference (PyTorch ConvBlock semantics, BN in train mode)."""
    conv = lax.conv_general_dilated(
        x, w, window_strides=(stride, stride),
        padding=((padding, padding), (padding, padding)),
        dimension_numbers=('NCHW', 'OIHW', 'NCHW'))
    conv = conv + b[None, :, None, None]
    mean = jnp.mean(conv, axis=(0, 2, 3), keepdims=True)
    var = jnp.mean(jnp.square(conv - mean), axis=(0, 2, 3), keepdims=True)
    y = (conv - mean) * lax.rsqrt(var + eps)
    y = y * gamma[None, :, None, None] + beta[None, :, None, None]
    y = jnp.tanh(y) if activation == 'tanh' else jnp.maximum(y, 0.0)
    return lax.reduce_window(y, -jnp.inf, lax.max,
                             window_dimensions=(1, 1, 3, 3),
                             window_strides=(1, 1, 2, 2), padding='VALID')


if __name__ == "__main__":
    key = jax.random.PRNGKey(0)
    k_x, k_w, k_b, k_g, k_bt = jax.random.split(key, 5)

    # Small shapes consistent with ConvBlock(in=4, out=8, k=3, stride=1, pad=1, 'tanh')
    N, Cin, Hin, Win = 2, 4, 16, 16
    Cout, K, stride, padding = 8, 3, 1, 1
    activation = 'tanh'

    x = jax.random.normal(k_x, (N, Cin, Hin, Win), jnp.float32)

    # Deterministic synthetic parameter init (Conv2d-like uniform bounds).
    fan_in = Cin * K * K
    bound = 1.0 / (fan_in ** 0.5)
    w = jax.random.uniform(k_w, (Cout, Cin, K, K), jnp.float32, -bound, bound)
    b = jax.random.uniform(k_b, (Cout,), jnp.float32, -bound, bound)
    gamma = 1.0 + 0.1 * jax.random.normal(k_g, (Cout,), jnp.float32)
    beta = 0.1 * jax.random.normal(k_bt, (Cout,), jnp.float32)

    out = conv_block_forward(x, w, b, gamma, beta,
                             stride=stride, padding=padding,
                             activation=activation)
    out = jax.block_until_ready(out)

    ref = conv_block_reference(x, w, b, gamma, beta,
                               stride=stride, padding=padding,
                               activation=activation)
    assert out.shape == ref.shape == (N, Cout, 7, 7), (out.shape, ref.shape)
    # Tolerance loosened from 2e-3 to 1e-2: the conv matmul now uses bf16 MXU
    # inputs (f32 accumulation); BN renormalizes so the error stays well inside.
    max_err = float(jnp.max(jnp.abs(out - ref)))
    assert max_err < 1e-2, max_err

    print("KERNEL_OK")
</pallas_src>

<mosaic_0001>
module attributes {stable_mosaic.version = 11 : i64} {
  func.func @_conv_block_kernel(%arg0: memref<2x18x72xf32, #tpu.memory_space<vmem>>, %arg1: memref<216x128xbf16, #tpu.memory_space<vmem>>, %arg2: memref<3x14x32xf32, #tpu.memory_space<vmem>>, %arg3: memref<128x128xf32, #tpu.memory_space<vmem>>, %arg4: memref<1x128xf32, #tpu.memory_space<vmem>>, %arg5: memref<1x128xf32, #tpu.memory_space<vmem>>, %arg6: memref<14x128xf32, #tpu.memory_space<vmem>>) attributes {dimension_semantics = [], scalar_prefetch = 0 : i64, scratch_operands = 0 : i64, tpu.core_type = #tpu.core_type<tc>} {
    %c0 = arith.constant 0 : index
    %c0_0 = arith.constant 0 : index
    %c0_1 = arith.constant 0 : index
    %0 = vector.load %arg0[%c0, %c0_0, %c0_1] : memref<2x18x72xf32, #tpu.memory_space<vmem>>, vector<2x18x72xf32>
    %1 = vector.extract_strided_slice %0 {offsets = [0, 0, 0], sizes = [2, 16, 72], strides = [1, 1, 1]} : vector<2x18x72xf32> to vector<2x16x72xf32>
    %2 = vector.extract_strided_slice %0 {offsets = [0, 1, 0], sizes = [2, 16, 72], strides = [1, 1, 1]} : vector<2x18x72xf32> to vector<2x16x72xf32>
    %3 = vector.extract_strided_slice %0 {offsets = [0, 2, 0], sizes = [2, 16, 72], strides = [1, 1, 1]} : vector<2x18x72xf32> to vector<2x16x72xf32>
    %4 = tpu.concatenate %1, %2, %3 in 2 : vector<2x16x72xf32>, vector<2x16x72xf32>, vector<2x16x72xf32> -> vector<2x16x216xf32>
    %5 = vector.shape_cast %4 : vector<2x16x216xf32> to vector<32x216xf32>
    %6 = arith.truncf %5 : vector<32x216xf32> to vector<32x216xbf16>
    %c0_2 = arith.constant 0 : index
    %c0_3 = arith.constant 0 : index
    %7 = vector.load %arg1[%c0_2, %c0_3] : memref<216x128xbf16, #tpu.memory_space<vmem>>, vector<216x128xbf16>
    %cst = arith.constant dense<0.000000e+00> : vector<32x128xf32>
    %8 = tpu.matmul %6, %7, %cst {dimension_numbers = #tpu.dot_dimension_numbers<[1], [0], [0], [1], [0, 0, 1, 1], [], []>} : vector<32x216xbf16>, vector<216x128xbf16>, vector<32x128xf32> -> vector<32x128xf32>
    %c0_4 = arith.constant 0 : index
    %c0_5 = arith.constant 0 : index
    %9 = vector.load %arg3[%c0_4, %c0_5] : memref<128x128xf32, #tpu.memory_space<vmem>>, vector<128x128xf32>
    %cst_6 = arith.constant dense<0.000000e+00> : vector<32x128xf32>
    %10 = tpu.matmul %8, %9, %cst_6 {dimension_numbers = #tpu.dot_dimension_numbers<[1], [0], [0], [1], [0, 0, 1, 1], [], []>} : vector<32x128xf32>, vector<128x128xf32>, vector<32x128xf32> -> vector<32x128xf32>
    %11 = arith.mulf %8, %8 : vector<32x128xf32>
    %cst_7 = arith.constant dense<0.000000e+00> : vector<32x128xf32>
    %12 = tpu.matmul %11, %9, %cst_7 {dimension_numbers = #tpu.dot_dimension_numbers<[1], [0], [0], [1], [0, 0, 1, 1], [], []>} : vector<32x128xf32>, vector<128x128xf32>, vector<32x128xf32> -> vector<32x128xf32>
    %cst_8 = arith.constant dense<0.000000e+00> : vector<128xf32>
    %13 = vector.multi_reduction <add>, %10, %cst_8 [0] : vector<32x128xf32> to vector<128xf32>
    %14 = vector.shape_cast %13 : vector<128xf32> to vector<1x128xf32>
    %cst_9 = arith.constant 0.001953125 : f32
    %15 = vector.broadcast %cst_9 : f32 to vector<1x128xf32>
    %16 = arith.mulf %14, %15 : vector<1x128xf32>
    %cst_10 = arith.constant dense<0.000000e+00> : vector<128xf32>
    %17 = vector.multi_reduction <add>, %12, %cst_10 [0] : vector<32x128xf32> to vector<128xf32>
    %18 = vector.shape_cast %17 : vector<128xf32> to vector<1x128xf32>
    %cst_11 = arith.constant 0.001953125 : f32
    %19 = vector.broadcast %cst_11 : f32 to vector<1x128xf32>
    %20 = arith.mulf %18, %19 : vector<1x128xf32>
    %21 = arith.mulf %16, %16 : vector<1x128xf32>
    %22 = arith.subf %20, %21 : vector<1x128xf32>
    %c0_12 = arith.constant 0 : index
    %c0_13 = arith.constant 0 : index
    %23 = vector.load %arg4[%c0_12, %c0_13] : memref<1x128xf32, #tpu.memory_space<vmem>>, vector<1x128xf32>
    %cst_14 = arith.constant 9.99999974E-6 : f32
    %24 = vector.broadcast %cst_14 : f32 to vector<1x128xf32>
    %25 = arith.addf %22, %24 : vector<1x128xf32>
    %26 = math.rsqrt %25 : vector<1x128xf32>
    %27 = arith.mulf %23, %26 : vector<1x128xf32>
    %c0_15 = arith.constant 0 : index
    %c0_16 = arith.constant 0 : index
    %28 = vector.load %arg5[%c0_15, %c0_16] : memref<1x128xf32, #tpu.memory_space<vmem>>, vector<1x128xf32>
    %29 = arith.mulf %16, %27 : vector<1x128xf32>
    %30 = arith.subf %28, %29 : vector<1x128xf32>
    %31 = vector.broadcast %27 : vector<1x128xf32> to vector<32x128xf32>
    %32 = arith.mulf %8, %31 : vector<32x128xf32>
    %33 = vector.broadcast %30 : vector<1x128xf32> to vector<32x128xf32>
    %34 = arith.addf %32, %33 : vector<32x128xf32>
    %c0_17 = arith.constant 0 : index
    %c0_18 = arith.constant 0 : index
    %c0_19 = arith.constant 0 : index
    %35 = vector.load %arg2[%c0_17, %c0_18, %c0_19] : memref<3x14x32xf32, #tpu.memory_space<vmem>>, vector<1x14x32xf32>
    %36 = vector.shape_cast %35 : vector<1x14x32xf32> to vector<14x32xf32>
    %cst_20 = arith.constant dense<0.000000e+00> : vector<14x128xf32>
    %37 = tpu.matmul %36, %34, %cst_20 {dimension_numbers = #tpu.dot_dimension_numbers<[1], [0], [0], [1], [0, 0, 1, 1], [], []>} : vector<14x32xf32>, vector<32x128xf32>, vector<14x128xf32> -> vector<14x128xf32>
    %c1 = arith.constant 1 : index
    %c0_21 = arith.constant 0 : index
    %c0_22 = arith.constant 0 : index
    %38 = vector.load %arg2[%c1, %c0_21, %c0_22] : memref<3x14x32xf32, #tpu.memory_space<vmem>>, vector<1x14x32xf32>
    %39 = vector.shape_cast %38 : vector<1x14x32xf32> to vector<14x32xf32>
    %cst_23 = arith.constant dense<0.000000e+00> : vector<14x128xf32>
    %40 = tpu.matmul %39, %34, %cst_23 {dimension_numbers = #tpu.dot_dimension_numbers<[1], [0], [0], [1], [0, 0, 1, 1], [], []>} : vector<14x32xf32>, vector<32x128xf32>, vector<14x128xf32> -> vector<14x128xf32>
    %c2 = arith.constant 2 : index
    %c0_24 = arith.constant 0 : index
    %c0_25 = arith.constant 0 : index
    %41 = vector.load %arg2[%c2, %c0_24, %c0_25] : memref<3x14x32xf32, #tpu.memory_space<vmem>>, vector<1x14x32xf32>
    %42 = vector.shape_cast %41 : vector<1x14x32xf32> to vector<14x32xf32>
    %cst_26 = arith.constant dense<0.000000e+00> : vector<14x128xf32>
    %43 = tpu.matmul %42, %34, %cst_26 {dimension_numbers = #tpu.dot_dimension_numbers<[1], [0], [0], [1], [0, 0, 1, 1], [], []>} : vector<14x32xf32>, vector<32x128xf32>, vector<14x128xf32> -> vector<14x128xf32>
    %44 = arith.maximumf %37, %40 : vector<14x128xf32>
    %45 = arith.maximumf %44, %43 : vector<14x128xf32>
    %46 = vector.extract_strided_slice %45 {offsets = [0, 8], sizes = [14, 120], strides = [1, 1]} : vector<14x128xf32> to vector<14x120xf32>
    %47 = vector.extract_strided_slice %45 {offsets = [0, 0], sizes = [14, 8], strides = [1, 1]} : vector<14x128xf32> to vector<14x8xf32>
    %48 = tpu.concatenate %46, %47 in 1 : vector<14x120xf32>, vector<14x8xf32> -> vector<14x128xf32>
    %49 = vector.extract_strided_slice %45 {offsets = [0, 16], sizes = [14, 112], strides = [1, 1]} : vector<14x128xf32> to vector<14x112xf32>
    %50 = vector.extract_strided_slice %45 {offsets = [0, 0], sizes = [14, 16], strides = [1, 1]} : vector<14x128xf32> to vector<14x16xf32>
    %51 = tpu.concatenate %49, %50 in 1 : vector<14x112xf32>, vector<14x16xf32> -> vector<14x128xf32>
    %52 = arith.maximumf %45, %48 : vector<14x128xf32>
    %53 = arith.maximumf %52, %51 : vector<14x128xf32>
    %54 = math.tanh %53 : vector<14x128xf32>
    %c0_27 = arith.constant 0 : index
    %c0_28 = arith.constant 0 : index
    %55 = vector.load %arg6[%c0_27, %c0_28] : memref<14x128xf32, #tpu.memory_space<vmem>>, vector<14x128xf32>
    tpu.vector_store %arg6[%c0_27, %c0_28], %54 {strides = array<i32>} : memref<14x128xf32, #tpu.memory_space<vmem>>, vector<14x128xf32>,
    return
  }
}

</mosaic_0001>

<llo_original>
// kernel: tpu_custom_call.1
$region0: #{tpu_custom_call.1}
  #allocation0 [shape = 'u32[]', space=smem, size = 0x4, offset = 0x4, fixed_abs, tag = 'smem constant byte address 0x4 - core index']
  #allocation1 [shape = 'u32[144,128]{1,0:T(1,128)}', space=vmem, size = 0x12000, scoped, tag = 'internal scratch']
  %s0 = inlined_call_operand.vmem [shape: f32[2,18,72], index: 0, kind: input, shape index: {}]
  %s1 = inlined_call_operand.hbm [shape: bf16[216,128], index: 1, kind: input, shape index: {}]
  %s2 = inlined_call_operand.vmem [shape: f32[3,14,32], index: 2, kind: input, shape index: {}]
  %s3 = inlined_call_operand.hbm [shape: f32[128,128], index: 3, kind: input, shape index: {}]
  %s4 = inlined_call_operand.vmem [shape: f32[1,128], index: 4, kind: input, shape index: {}]
  %s5 = inlined_call_operand.vmem [shape: f32[1,128], index: 5, kind: input, shape index: {}]
  %s6 = inlined_call_operand.hbm [shape: f32[14,128], index: 6, kind: output, shape index: {}]
  %s7 = sld [smem:[#allocation0]]
  $region42: #{tpu_custom_call.1} parent=0
    _
  %s9 = ssub.s32 1, %s7
  %s10 = scalar_select 0, %s9, %s7
  $region1: #{tpu_custom_call.1} parent=0
    #allocation2 [shape = 'u8[55296]{0}', space=vmem, size = 0xd800, scoped, tag = 'input window, operand 1, single buffered']
    #allocation3 [shape = 's32[1]{0}', space=sflag, size = 0x4, scoped, tag = 'scoped memory for tpu_custom_call.1']
    #allocation4 [shape = 's32[1]{0}', space=sflag, size = 0x4, scoped, tag = 'scoped memory for tpu_custom_call.1']
    #allocation5 [shape = 'u8[65536]{0}', space=vmem, size = 0x10000, scoped, tag = 'input window, operand 3, single buffered']
    #allocation6 [shape = 's32[1]{0}', space=sflag, size = 0x4, scoped, tag = 'scoped memory for tpu_custom_call.1']
    #allocation7 [shape = 'u8[8192]{0}', space=vmem, size = 0x2000, scoped, tag = 'output window, operand 0, single buffered']
    %11 = vsyncpa [#allocation3], 0
    %12 = vsyncpa [#allocation6], 0
    %13 = vsyncpa [#allocation4], 0
    // Predicated region
    $region2: #{tpu_custom_call.1} parent=1 // pred_check
      _
    $region3: #{tpu_custom_call.1} parent=1 // pred_check_branch
      %15 = sbr.rel (0) target = $region5
    $region4: #{tpu_custom_call.1} parent=1 // pred_region
      _
    $region5: #{tpu_custom_call.1} parent=1 // pred_fallthru
      _
    // Predicated region
    $region6: #{tpu_custom_call.1} parent=1 // pred_check
      _
    $region7: #{tpu_custom_call.1} parent=1 // pred_check_branch
      %17 = sbr.rel (0) target = $region9
    $region8: #{tpu_custom_call.1} parent=1 // pred_region
      %s19 = ssub.s32 1728, 1728
      %20 = vsyncadd [#allocation3], %s19
      %s21 = sshll.u32 [#allocation2], 4
      %s22 = int_to_ptr.vmem [resolvable:$true] %s21
      %27 = dma.hbm_to_vmem [thread:$0]  %s1, 1728, %s22, [#allocation3], 64, 64, 4
    $region9: #{tpu_custom_call.1} parent=1 // pred_fallthru
      _
    // Predicated region
    $region10: #{tpu_custom_call.1} parent=1 // pred_check
      _
    $region11: #{tpu_custom_call.1} parent=1 // pred_check_branch
      %29 = sbr.rel (0) target = $region13
    $region12: #{tpu_custom_call.1} parent=1 // pred_region
      _
    $region13: #{tpu_custom_call.1} parent=1 // pred_fallthru
      _
    // Predicated region
    $region14: #{tpu_custom_call.1} parent=1 // pred_check
      _
    $region15: #{tpu_custom_call.1} parent=1 // pred_check_branch
      %31 = sbr.rel (0) target = $region17
    $region16: #{tpu_custom_call.1} parent=1 // pred_region
      %s33 = ssub.s32 2048, 2048
      %34 = vsyncadd [#allocation6], %s33
      %s35 = sshll.u32 [#allocation5], 4
      %s36 = int_to_ptr.vmem [resolvable:$true] %s35
      %41 = dma.hbm_to_vmem [thread:$0]  %s3, 2048, %s36, [#allocation6], 128, 128, 8
    $region17: #{tpu_custom_call.1} parent=1 // pred_fallthru
      _
    // Predicated region
    $region18: #{tpu_custom_call.1} parent=1 // pred_check
      _
    $region19: #{tpu_custom_call.1} parent=1 // pred_check_branch
      %43 = sbr.rel (0) target = $region21
    $region20: #{tpu_custom_call.1} parent=1 // pred_region
      _
    $region21: #{tpu_custom_call.1} parent=1 // pred_fallthru
      _
    // Predicated region
    $region22: #{tpu_custom_call.1} parent=1 // pred_check
      _
    $region23: #{tpu_custom_call.1} parent=1 // pred_check_branch
      %45 = sbr.rel (0) target = $region25
    $region24: #{tpu_custom_call.1} parent=1 // pred_region
      _
    $region25: #{tpu_custom_call.1} parent=1 // pred_fallthru
      _
    // Predicated region
    $region26: #{tpu_custom_call.1} parent=1 // pred_check
      _
    $region27: #{tpu_custom_call.1} parent=1 // pred_check_branch
      %47 = sbr.rel (0) target = $region29
    $region28: #{tpu_custom_call.1} parent=1 // pred_region
      %48 = dma.done [#allocation3], 1728
    $region29: #{tpu_custom_call.1} parent=1 // pred_fallthru
      _
    // Predicated region
    $region30: #{tpu_custom_call.1} parent=1 // pred_check
      _
    $region31: #{tpu_custom_call.1} parent=1 // pred_check_branch
      %50 = sbr.rel (0) target = $region33
    $region32: #{tpu_custom_call.1} parent=1 // pred_region
      %51 = dma.done [#allocation6], 2048
    $region33: #{tpu_custom_call.1} parent=1 // pred_fallthru
      _
    %v53 = vld [vmem:[%s0] sm:$0xff]
    %v54 = vld [vmem:[%s0 + $0x8] sm:$0xff]
    %v55 = vld [vmem:[%s0 + $0x10] sm:$0x3]
    %v56 = vld [vmem:[%s0 + $0x18] sm:$0xff]
    %v57 = vld [vmem:[%s0 + $0x20] sm:$0xff]
    %v58 = vld [vmem:[%s0 + $0x28] sm:$0x3]
    %vm65 = vcmask 1046528
    %v66 = vrot.slane %v53, 1
    %v67 = vrot.slane %v54, 1
    %v68 = vsel %vm65, %v66, %v67
    %v69 = vrot.slane %v55, 1
    %v70 = vsel %vm65, %v67, %v69
    %v71 = vrot.slane %v56, 1
    %v72 = vrot.slane %v57, 1
    %v73 = vsel %vm65, %v71, %v72
    %v74 = vrot.slane %v58, 1
    %v75 = vsel %vm65, %v72, %v74
    %76 = vrot.lane.b32.xlu0 %v68, 72
    %v77 = vpop.permute.xlu0 %76
    %78 = vrot.lane.b32.xlu0 %v70, 72
    %v79 = vpop.permute.xlu0 %78
    %80 = vrot.lane.b32.xlu0 %v73, 72
    %v81 = vpop.permute.xlu0 %80
    %82 = vrot.lane.b32.xlu0 %v75, 72
    %v83 = vpop.permute.xlu0 %82
    %vm88 = vcmask 1045504
    %v89 = vrot.slane %v53, 2
    %v90 = vrot.slane %v54, 2
    %v91 = vsel %vm88, %v89, %v90
    %v92 = vrot.slane %v55, 2
    %v93 = vsel %vm88, %v90, %v92
    %v94 = vrot.slane %v56, 2
    %v95 = vrot.slane %v57, 2
    %v96 = vsel %vm88, %v94, %v95
    %v97 = vrot.slane %v58, 2
    %v98 = vsel %vm88, %v95, %v97
    %99 = vrot.lane.b32.xlu0 %v91, 16
    %v100 = vpop.permute.xlu0 %99
    %101 = vrot.lane.b32.xlu0 %v93, 16
    %v102 = vpop.permute.xlu0 %101
    %103 = vrot.lane.b32.xlu0 %v96, 16
    %v104 = vpop.permute.xlu0 %103
    %105 = vrot.lane.b32.xlu0 %v98, 16
    %v106 = vpop.permute.xlu0 %105
    %vm111 = vcmask 588800
    %v112 = vsel %vm111, %v53, %v77
    %v113 = vsel %vm111, %v54, %v79
    %v114 = vsel %vm111, %v56, %v81
    %v115 = vsel %vm111, %v57, %v83
    %vm116 = vcmask 130048
    %v117 = vsel %vm116, %v77, %v100
    %v118 = vsel %vm116, %v79, %v102
    %v119 = vsel %vm116, %v81, %v104
    %v120 = vsel %vm116, %v83, %v106
    %v121 = vpack.c.bf16 %v113, %v112
    %v122 = vpack.c.bf16 %v118, %v117
    %v123 = vpack.c.bf16 %v115, %v114
    %v124 = vpack.c.bf16 %v120, %v119
    %v125 = vld [vmem:[#allocation2] sm:$0xf]
    %v126 = vld [vmem:[#allocation2 + $0x4] sm:$0xf]
    %v127 = vld [vmem:[#allocation2 + $0x8] sm:$0xf]
    %v128 = vld [vmem:[#allocation2 + $0xc] sm:$0xf]
    %v129 = vld [vmem:[#allocation2 + $0x10] sm:$0xf]
    %v130 = vld [vmem:[#allocation2 + $0x14] sm:$0xf]
    %v131 = vld [vmem:[#allocation2 + $0x18] sm:$0xf]
    %v132 = vld [vmem:[#allocation2 + $0x1c] sm:$0xf]
    %v133 = vld [vmem:[#allocation2 + $0x20] sm:$0xf]
    %v134 = vld [vmem:[#allocation2 + $0x24] sm:$0xf]
    %v135 = vld [vmem:[#allocation2 + $0x28] sm:$0xf]
    %v136 = vld [vmem:[#allocation2 + $0x2c] sm:$0xf]
    %v137 = vld [vmem:[#allocation2 + $0x30] sm:$0xf]
    %v138 = vld [vmem:[#allocation2 + $0x34] sm:$0xf]
    %v139 = vld [vmem:[#allocation2 + $0x38] sm:$0xf]
    %v140 = vld [vmem:[#allocation2 + $0x3c] sm:$0xf]
    %v141 = vld [vmem:[#allocation2 + $0x40] sm:$0xf]
    %v142 = vld [vmem:[#allocation2 + $0x44] sm:$0xf]
    %v143 = vld [vmem:[#allocation2 + $0x48] sm:$0xf]
    %v144 = vld [vmem:[#allocation2 + $0x4c] sm:$0xf]
    %v145 = vld [vmem:[#allocation2 + $0x50] sm:$0xf]
    %v146 = vld [vmem:[#allocation2 + $0x54] sm:$0xf]
    %v147 = vld [vmem:[#allocation2 + $0x58] sm:$0xf]
    %v148 = vld [vmem:[#allocation2 + $0x5c] sm:$0xf]
    %v149 = vld [vmem:[#allocation2 + $0x60] sm:$0xf]
    %v150 = vld [vmem:[#allocation2 + $0x64] sm:$0xf]
    %v151 = vld [vmem:[#allocation2 + $0x68] sm:$0xf]
    %v179 = vunpack.c.l.b16 %v125
    %v180 = vunpack.c.l.b16 %v126
    %v181 = vunpack.c.l.b16 %v127
    %v182 = vunpack.c.l.b16 %v128
    %v183 = vunpack.c.l.b16 %v129
    %v184 = vunpack.c.l.b16 %v130
    %v185 = vunpack.c.l.b16 %v131
    %v186 = vunpack.c.l.b16 %v132
    %v187 = vunpack.c.l.b16 %v133
    %v188 = vunpack.c.l.b16 %v134
    %v189 = vunpack.c.l.b16 %v135
    %v190 = vunpack.c.l.b16 %v136
    %v191 = vunpack.c.l.b16 %v137
    %v192 = vunpack.c.l.b16 %v138
    %v193 = vunpack.c.l.b16 %v139
    %v194 = vunpack.c.l.b16 %v140
    %v195 = vunpack.c.l.b16 %v141
    %v196 = vunpack.c.l.b16 %v142
    %v197 = vunpack.c.l.b16 %v143
    %v198 = vunpack.c.l.b16 %v144
    %v199 = vunpack.c.l.b16 %v145
    %v200 = vunpack.c.l.b16 %v146
    %v201 = vunpack.c.l.b16 %v147
    %v202 = vunpack.c.l.b16 %v148
    %v203 = vunpack.c.l.b16 %v149
    %v204 = vunpack.c.l.b16 %v150
    %v205 = vunpack.c.l.b16 %v151
    %v206 = vpack.c.b16 %v180, %v179
    %v207 = vpack.c.b16 %v182, %v181
    %v208 = vpack.c.b16 %v184, %v183
    %v209 = vpack.c.b16 %v186, %v185
    %v210 = vpack.c.b16 %v188, %v187
    %v211 = vpack.c.b16 %v190, %v189
    %v212 = vpack.c.b16 %v192, %v191
    %v213 = vpack.c.b16 %v194, %v193
    %v214 = vpack.c.b16 %v196, %v195
    %v215 = vpack.c.b16 %v198, %v197
    %v216 = vpack.c.b16 %v200, %v199
    %v217 = vpack.c.b16 %v202, %v201
    %v218 = vpack.c.b16 %v204, %v203
    %v219 = vpack.c.b16 %v205, %v205
    %vm233 = vcmask 719872
    %v235 = vsel %vm233, %v122, 0
    %v238 = vsel %vm233, %v124, 0
    %vm240 = vcmask 1043456
    %v242 = vsel %vm240, %v219, 0
    %244 = vmatprep.subr.bf16.mxu0 0
    %245 = vmatpush1.bf16.msra.mxu0 %v213
    %246 = vmatprep.subr.bf16.mxu0 0
    %247 = vmatpush1.bf16.msra.mxu0 %v212
    %248 = vmatprep.subr.bf16.mxu0 0
    %249 = vmatpush1.bf16.msra.mxu0 %v211
    %250 = vmatprep.subr.bf16.mxu0 0
    %251 = vmatpush1.bf16.msra.mxu0 %v210
    %252 = vmatprep.subr.bf16.mxu0 0
    %253 = vmatpush1.bf16.msra.mxu0 %v209
    %254 = vmatprep.subr.bf16.mxu0 0
    %255 = vmatpush1.bf16.msra.mxu0 %v208
    %256 = vmatprep.subr.bf16.mxu0 0
    %257 = vmatpush1.bf16.msra.mxu0 %v207
    %258 = vmatprep.subr.bf16.mxu0 0
    %259 = vmatpush1.bf16.msra.mxu0 %v206
    %260 = vmatprep.subr.bf16.mxu0 0
    %261 = vmatpush2.bf16.msra.mxu0 0
    %262 = vmatprep.subr.bf16.mxu0 0
    %263 = vmatpush2.bf16.msra.mxu0 0
    %264 = vmatprep.subr.bf16.mxu0 0
    %265 = vmatpush2.bf16.msra.mxu0 %v242
    %266 = vmatprep.subr.bf16.mxu0 0
    %267 = vmatpush2.bf16.msra.mxu0 %v218
    %268 = vmatprep.subr.bf16.mxu0 0
    %269 = vmatpush2.bf16.msra.mxu0 %v217
    %270 = vmatprep.subr.bf16.mxu0 0
    %271 = vmatpush2.bf16.msra.mxu0 %v216
    %272 = vmatprep.subr.bf16.mxu0 0
    %273 = vmatpush2.bf16.msra.mxu0 %v215
    %274 = vmatprep.subr.bf16.mxu0 0
    %275 = vmatpush2.bf16.msra.mxu0 %v214
    %276 = vmatprep.mubr.bf16.mxu0 %v235
    %277 = vmatmul.mubr.bf16.gmra.mxu0 %v121
    %v278 = vpop.f32.mrf.mxu0
    %v279 = vadd.f32 0.0, %v278
    %v280 = vpop.f32.mrf.mxu0
    %v281 = vpop.f32.mrf.mxu0
    %v282 = vadd.f32 0.0, %v281
    %v283 = vpop.f32.mrf.mxu0
    %284 = vmatprep.mubr.bf16.mxu0 %v238
    %285 = vmatmul.mubr.bf16.gmra.mxu0 %v123
    %v286 = vpop.f32.mrf.mxu0
    %v287 = vadd.f32 0.0, %v286
    %v288 = vpop.f32.mrf.mxu0
    %v289 = vpop.f32.mrf.mxu0
    %v290 = vadd.f32 0.0, %v289
    %v291 = vpop.f32.mrf.mxu0
    %292 = vdwg.mxu0
    %v293 = vld [vmem:[#allocation5] sm:$0xff]
    %v294 = vld [vmem:[#allocation5 + $0x8] sm:$0xff]
    %v295 = vld [vmem:[#allocation5 + $0x10] sm:$0xff]
    %v296 = vld [vmem:[#allocation5 + $0x18] sm:$0xff]
    %v297 = vld [vmem:[#allocation5 + $0x20] sm:$0xff]
    %v298 = vld [vmem:[#allocation5 + $0x28] sm:$0xff]
    %v299 = vld [vmem:[#allocation5 + $0x30] sm:$0xff]
    %v300 = vld [vmem:[#allocation5 + $0x38] sm:$0xff]
    %v301 = vld [vmem:[#allocation5 + $0x40] sm:$0xff]
    %v302 = vld [vmem:[#allocation5 + $0x48] sm:$0xff]
    %v303 = vld [vmem:[#allocation5 + $0x50] sm:$0xff]
    %v304 = vld [vmem:[#allocation5 + $0x58] sm:$0xff]
    %v305 = vld [vmem:[#allocation5 + $0x60] sm:$0xff]
    %v306 = vld [vmem:[#allocation5 + $0x68] sm:$0xff]
    %v307 = vld [vmem:[#allocation5 + $0x70] sm:$0xff]
    %v308 = vld [vmem:[#allocation5 + $0x78] sm:$0xff]
    %309 = vmatprep.subr.mxu0 0.0
    %310 = vmatpush1.msra.mxu0 %v308
    %311 = vmatprep.subr.mxu0 0.0
    %312 = vmatpush1.msra.mxu0 %v307
    %313 = vmatprep.subr.mxu0 0.0
    %314 = vmatpush1.msra.mxu0 %v306
    %315 = vmatprep.subr.mxu0 0.0
    %316 = vmatpush1.msra.mxu0 %v305
    %317 = vmatprep.subr.mxu0 0.0
    %318 = vmatpush1.msra.mxu0 %v304
    %319 = vmatprep.subr.mxu0 0.0
    %320 = vmatpush1.msra.mxu0 %v303
    %321 = vmatprep.subr.mxu0 0.0
    %322 = vmatpush1.msra.mxu0 %v302
    %323 = vmatprep.subr.mxu0 0.0
    %324 = vmatpush1.msra.mxu0 %v301
    %325 = vmatprep.subr.mxu0 0.0
    %326 = vmatpush1.msra.mxu0 %v300
    %327 = vmatprep.subr.mxu0 0.0
    %328 = vmatpush1.msra.mxu0 %v299
    %329 = vmatprep.subr.mxu0 0.0
    %330 = vmatpush1.msra.mxu0 %v298
    %331 = vmatprep.subr.mxu0 0.0
    %332 = vmatpush1.msra.mxu0 %v297
    %333 = vmatprep.subr.mxu0 0.0
    %334 = vmatpush1.msra.mxu0 %v296
    %335 = vmatprep.subr.mxu0 0.0
    %336 = vmatpush1.msra.mxu0 %v295
    %337 = vmatprep.subr.mxu0 0.0
    %338 = vmatpush1.msra.mxu0 %v294
    %339 = vmatprep.subr.mxu0 0.0
    %340 = vmatpush1.msra.mxu0 %v293
    %341 = vmatprep.subr.mxu0 0.0
    %342 = vmatpush2.msra.mxu0 0.0
    %343 = vmatprep.subr.mxu0 0.0
    %344 = vmatpush2.msra.mxu0 0.0
    %345 = vmatprep.subr.mxu0 0.0
    %346 = vmatpush2.msra.mxu0 0.0
    %347 = vmatprep.subr.mxu0 0.0
    %348 = vmatpush2.msra.mxu0 0.0
    %349 = vmatprep.subr.mxu0 0.0
    %350 = vmatpush2.msra.mxu0 0.0
    %351 = vmatprep.subr.mxu0 0.0
    %352 = vmatpush2.msra.mxu0 0.0
    %353 = vmatprep.subr.mxu0 0.0
    %354 = vmatpush2.msra.mxu0 0.0
    %355 = vmatprep.subr.mxu0 0.0
    %356 = vmatpush2.msra.mxu0 0.0
    %357 = vmatprep.subr.mxu0 0.0
    %358 = vmatpush2.msra.mxu0 0.0
    %359 = vmatprep.subr.mxu0 0.0
    %360 = vmatpush2.msra.mxu0 0.0
    %361 = vmatprep.subr.mxu0 0.0
    %362 = vmatpush2.msra.mxu0 0.0
    %363 = vmatprep.subr.mxu0 0.0
    %364 = vmatpush2.msra.mxu0 0.0
    %365 = vmatprep.subr.mxu0 0.0
    %366 = vmatpush2.msra.mxu0 0.0
    %367 = vmatprep.subr.mxu0 0.0
    %368 = vmatpush2.msra.mxu0 0.0
    %369 = vmatprep.subr.mxu0 0.0
    %370 = vmatpush2.msra.mxu0 0.0
    %371 = vmatprep.subr.mxu0 0.0
    %372 = vmatpush2.msra.mxu0 0.0
    %373 = vmatprep.mubr.f32.mxu0 0.0
    %374 = vmatmul.mubr.f32.gmra.mxu0 %v279
    %v375 = vpop.f32.mrf.mxu0
    %v376 = vadd.f32 0.0, %v375
    %v377 = vpop.f32.mrf.mxu0
    %378 = vmatprep.mubr.f32.mxu0 0.0
    %379 = vmatmul.mubr.f32.gmra.mxu0 %v282
    %v380 = vpop.f32.mrf.mxu0
    %v381 = vadd.f32 0.0, %v380
    %v382 = vpop.f32.mrf.mxu0
    %383 = vmatprep.mubr.f32.mxu0 0.0
    %384 = vmatmul.mubr.f32.gmra.mxu0 %v287
    %v385 = vpop.f32.mrf.mxu0
    %v386 = vadd.f32 0.0, %v385
    %v387 = vpop.f32.mrf.mxu0
    %388 = vmatprep.mubr.f32.mxu0 0.0
    %389 = vmatmul.mubr.f32.gmra.mxu0 %v290
    %v390 = vpop.f32.mrf.mxu0
    %v391 = vadd.f32 0.0, %v390
    %v392 = vpop.f32.mrf.mxu0
    %393 = vdwg.mxu0
    %v394 = vmul.f32 %v279, %v279
    %v395 = vmul.f32 %v282, %v282
    %v396 = vmul.f32 %v287, %v287
    %v397 = vmul.f32 %v290, %v290
    %398 = vmatprep.subr.mxu0 0.0
    %399 = vmatpush1.msra.mxu0 %v308
    %400 = vmatprep.subr.mxu0 0.0
    %401 = vmatpush1.msra.mxu0 %v307
    %402 = vmatprep.subr.mxu0 0.0
    %403 = vmatpush1.msra.mxu0 %v306
    %404 = vmatprep.subr.mxu0 0.0
    %405 = vmatpush1.msra.mxu0 %v305
    %406 = vmatprep.subr.mxu0 0.0
    %407 = vmatpush1.msra.mxu0 %v304
    %408 = vmatprep.subr.mxu0 0.0
    %409 = vmatpush1.msra.mxu0 %v303
    %410 = vmatprep.subr.mxu0 0.0
    %411 = vmatpush1.msra.mxu0 %v302
    %412 = vmatprep.subr.mxu0 0.0
    %413 = vmatpush1.msra.mxu0 %v301
    %414 = vmatprep.subr.mxu0 0.0
    %415 = vmatpush1.msra.mxu0 %v300
    %416 = vmatprep.subr.mxu0 0.0
    %417 = vmatpush1.msra.mxu0 %v299
    %418 = vmatprep.subr.mxu0 0.0
    %419 = vmatpush1.msra.mxu0 %v298
    %420 = vmatprep.subr.mxu0 0.0
    %421 = vmatpush1.msra.mxu0 %v297
    %422 = vmatprep.subr.mxu0 0.0
    %423 = vmatpush1.msra.mxu0 %v296
    %424 = vmatprep.subr.mxu0 0.0
    %425 = vmatpush1.msra.mxu0 %v295
    %426 = vmatprep.subr.mxu0 0.0
    %427 = vmatpush1.msra.mxu0 %v294
    %428 = vmatprep.subr.mxu0 0.0
    %429 = vmatpush1.msra.mxu0 %v293
    %430 = vmatprep.subr.mxu0 0.0
    %431 = vmatpush2.msra.mxu0 0.0
    %432 = vmatprep.subr.mxu0 0.0
    %433 = vmatpush2.msra.mxu0 0.0
    %434 = vmatprep.subr.mxu0 0.0
    %435 = vmatpush2.msra.mxu0 0.0
    %436 = vmatprep.subr.mxu0 0.0
    %437 = vmatpush2.msra.mxu0 0.0
    %438 = vmatprep.subr.mxu0 0.0
    %439 = vmatpush2.msra.mxu0 0.0
    %440 = vmatprep.subr.mxu0 0.0
    %441 = vmatpush2.msra.mxu0 0.0
    %442 = vmatprep.subr.mxu0 0.0
    %443 = vmatpush2.msra.mxu0 0.0
    %444 = vmatprep.subr.mxu0 0.0
    %445 = vmatpush2.msra.mxu0 0.0
    %446 = vmatprep.subr.mxu0 0.0
    %447 = vmatpush2.msra.mxu0 0.0
    %448 = vmatprep.subr.mxu0 0.0
    %449 = vmatpush2.msra.mxu0 0.0
    %450 = vmatprep.subr.mxu0 0.0
    %451 = vmatpush2.msra.mxu0 0.0
    %452 = vmatprep.subr.mxu0 0.0
    %453 = vmatpush2.msra.mxu0 0.0
    %454 = vmatprep.subr.mxu0 0.0
    %455 = vmatpush2.msra.mxu0 0.0
    %456 = vmatprep.subr.mxu0 0.0
    %457 = vmatpush2.msra.mxu0 0.0
    %458 = vmatprep.subr.mxu0 0.0
    %459 = vmatpush2.msra.mxu0 0.0
    %460 = vmatprep.subr.mxu0 0.0
    %461 = vmatpush2.msra.mxu0 0.0
    %462 = vmatprep.mubr.f32.mxu0 0.0
    %463 = vmatmul.mubr.f32.gmra.mxu0 %v394
    %v464 = vpop.f32.mrf.mxu0
    %v465 = vadd.f32 0.0, %v464
    %v466 = vpop.f32.mrf.mxu0
    %467 = vmatprep.mubr.f32.mxu0 0.0
    %468 = vmatmul.mubr.f32.gmra.mxu0 %v395
    %v469 = vpop.f32.mrf.mxu0
    %v470 = vadd.f32 0.0, %v469
    %v471 = vpop.f32.mrf.mxu0
    %472 = vmatprep.mubr.f32.mxu0 0.0
    %473 = vmatmul.mubr.f32.gmra.mxu0 %v396
    %v474 = vpop.f32.mrf.mxu0
    %v475 = vadd.f32 0.0, %v474
    %v476 = vpop.f32.mrf.mxu0
    %477 = vmatprep.mubr.f32.mxu0 0.0
    %478 = vmatmul.mubr.f32.gmra.mxu0 %v397
    %v479 = vpop.f32.mrf.mxu0
    %v480 = vadd.f32 0.0, %v479
    %v481 = vpop.f32.mrf.mxu0
    %482 = vdwg.mxu0
    %v483 = vadd.f32 %v376, %v381
    %v484 = vadd.f32 %v483, %v386
    %v485 = vadd.f32 %v484, %v391
    %v486 = vrot.slane %v485, 4
    %v487 = vadd.f32 %v485, %v486
    %v488 = vrot.slane %v487, 2
    %v489 = vadd.f32 %v487, %v488
    %v490 = vrot.slane %v489, 1
    %v491 = vadd.f32 %v489, %v490
    %v492 = vmul.f32 %v491, 0.001953125
    %v493 = vadd.f32 %v465, %v470
    %v494 = vadd.f32 %v493, %v475
    %v495 = vadd.f32 %v494, %v480
    %v496 = vrot.slane %v495, 4
    %v497 = vadd.f32 %v495, %v496
    %v498 = vrot.slane %v497, 2
    %v499 = vadd.f32 %v497, %v498
    %v500 = vrot.slane %v499, 1
    %v501 = vadd.f32 %v499, %v500
    %v502 = vmul.f32 %v501, 0.001953125
    %v503 = vmul.f32 %v492, %v492
    %v504 = vsub.f32 %v502, %v503
    %v505 = vld [vmem:[%s4] sm:$0x1]
    %v506 = vadd.f32 %v504, 1e-05
    %v507 = vrsqrt.pop %v506
    %v508 = vmul.f32 %v505, %v507
    %v509 = vld [vmem:[%s5] sm:$0x1]
    %v510 = vmul.f32 %v492, %v508
    %v511 = vsub.f32 %v509, %v510
    %v513 = vlaneseq
    %v514 = vshrl.u32 %v513, 7
    %v515 = vsub.s32 0, %v514
    %v516 = vrot.slane %v508, %v515
    %v518 = vmul.f32 %v279, %v516
    %v519 = vmul.f32 %v282, %v516
    %v520 = vmul.f32 %v287, %v516
    %v521 = vmul.f32 %v290, %v516
    %v523 = vlaneseq
    %v524 = vshrl.u32 %v523, 7
    %v525 = vsub.s32 0, %v524
    %v526 = vrot.slane %v511, %v525
    %v528 = vadd.f32 %v518, %v526
    %v529 = vadd.f32 %v519, %v526
    %v530 = vadd.f32 %v520, %v526
    %v531 = vadd.f32 %v521, %v526
    %v532 = vld [vmem:[%s2] sm:$0xff]
    %v533 = vld [vmem:[%s2 + $0x8] sm:$0x3f]
    %vm534 = vcmask 261120
    %v536 = vsel %vm534, %v532, 0
    %v539 = vsel %vm534, %v533, 0
    %541 = vmatprep.subr.mxu0 0.0
    %542 = vmatpush1.msra.mxu0 0.0
    %543 = vmatprep.subr.mxu0 0.0
    %544 = vmatpush1.msra.mxu0 0.0
    %545 = vmatprep.subr.mxu0 0.0
    %546 = vmatpush1.msra.mxu0 0.0
    %547 = vmatprep.subr.mxu0 0.0
    %548 = vmatpush1.msra.mxu0 0.0
    %549 = vmatprep.subr.mxu0 0.0
    %550 = vmatpush1.msra.mxu0 0.0
    %551 = vmatprep.subr.mxu0 0.0
    %552 = vmatpush1.msra.mxu0 0.0
    %553 = vmatprep.subr.mxu0 0.0
    %554 = vmatpush1.msra.mxu0 0.0
    %555 = vmatprep.subr.mxu0 0.0
    %556 = vmatpush1.msra.mxu0 0.0
    %557 = vmatprep.subr.mxu0 0.0
    %558 = vmatpush1.msra.mxu0 0.0
    %559 = vmatprep.subr.mxu0 0.0
    %560 = vmatpush1.msra.mxu0 0.0
    %561 = vmatprep.subr.mxu0 0.0
    %562 = vmatpush1.msra.mxu0 0.0
    %563 = vmatprep.subr.mxu0 0.0
    %564 = vmatpush1.msra.mxu0 0.0
    %565 = vmatprep.subr.mxu0 0.0
    %566 = vmatpush1.msra.mxu0 %v531
    %567 = vmatprep.subr.mxu0 0.0
    %568 = vmatpush1.msra.mxu0 %v530
    %569 = vmatprep.subr.mxu0 0.0
    %570 = vmatpush1.msra.mxu0 %v529
    %571 = vmatprep.subr.mxu0 0.0
    %572 = vmatpush1.msra.mxu0 %v528
    %573 = vmatprep.subr.mxu0 0.0
    %574 = vmatpush2.msra.mxu0 0.0
    %575 = vmatprep.subr.mxu0 0.0
    %576 = vmatpush2.msra.mxu0 0.0
    %577 = vmatprep.subr.mxu0 0.0
    %578 = vmatpush2.msra.mxu0 0.0
    %579 = vmatprep.subr.mxu0 0.0
    %580 = vmatpush2.msra.mxu0 0.0
    %581 = vmatprep.subr.mxu0 0.0
    %582 = vmatpush2.msra.mxu0 0.0
    %583 = vmatprep.subr.mxu0 0.0
    %584 = vmatpush2.msra.mxu0 0.0
    %585 = vmatprep.subr.mxu0 0.0
    %586 = vmatpush2.msra.mxu0 0.0
    %587 = vmatprep.subr.mxu0 0.0
    %588 = vmatpush2.msra.mxu0 0.0
    %589 = vmatprep.subr.mxu0 0.0
    %590 = vmatpush2.msra.mxu0 0.0
    %591 = vmatprep.subr.mxu0 0.0
    %592 = vmatpush2.msra.mxu0 0.0
    %593 = vmatprep.subr.mxu0 0.0
    %594 = vmatpush2.msra.mxu0 0.0
    %595 = vmatprep.subr.mxu0 0.0
    %596 = vmatpush2.msra.mxu0 0.0
    %597 = vmatprep.subr.mxu0 0.0
    %598 = vmatpush2.msra.mxu0 0.0
    %599 = vmatprep.subr.mxu0 0.0
    %600 = vmatpush2.msra.mxu0 0.0
    %601 = vmatprep.subr.mxu0 0.0
    %602 = vmatpush2.msra.mxu0 0.0
    %603 = vmatprep.subr.mxu0 0.0
    %604 = vmatpush2.msra.mxu0 0.0
    %605 = vmatprep.mubr.f32.mxu0 0.0
    %606 = vmatmul.mubr.f32.gmra.mxu0 %v536
    %v607 = vpop.f32.mrf.mxu0
    %v608 = vadd.f32 0.0, %v607
    %v609 = vpop.f32.mrf.mxu0
    %610 = vmatprep.mubr.f32.mxu0 0.0
    %611 = vmatmul.mubr.f32.gmra.mxu0 %v539
    %v612 = vpop.f32.mrf.mxu0
    %v613 = vadd.f32 0.0, %v612
    %v614 = vpop.f32.mrf.mxu0
    %615 = vdwg.mxu0
    %s616 = scalar_lea.vmem %s2, 16
    %v617 = vld [vmem:[%s616] sm:$0xff]
    %v618 = vld [vmem:[%s616 + $0x8] sm:$0x3f]
    %v620 = vsel %vm534, %v617, 0
    %v623 = vsel %vm534, %v618, 0
    %625 = vmatprep.subr.mxu0 0.0
    %626 = vmatpush1.msra.mxu0 0.0
    %627 = vmatprep.subr.mxu0 0.0
    %628 = vmatpush1.msra.mxu0 0.0
    %629 = vmatprep.subr.mxu0 0.0
    %630 = vmatpush1.msra.mxu0 0.0
    %631 = vmatprep.subr.mxu0 0.0
    %632 = vmatpush1.msra.mxu0 0.0
    %633 = vmatprep.subr.mxu0 0.0
    %634 = vmatpush1.msra.mxu0 0.0
    %635 = vmatprep.subr.mxu0 0.0
    %636 = vmatpush1.msra.mxu0 0.0
    %637 = vmatprep.subr.mxu0 0.0
    %638 = vmatpush1.msra.mxu0 0.0
    %639 = vmatprep.subr.mxu0 0.0
    %640 = vmatpush1.msra.mxu0 0.0
    %641 = vmatprep.subr.mxu0 0.0
    %642 = vmatpush1.msra.mxu0 0.0
    %643 = vmatprep.subr.mxu0 0.0
    %644 = vmatpush1.msra.mxu0 0.0
    %645 = vmatprep.subr.mxu0 0.0
    %646 = vmatpush1.msra.mxu0 0.0
    %647 = vmatprep.subr.mxu0 0.0
    %648 = vmatpush1.msra.mxu0 0.0
    %649 = vmatprep.subr.mxu0 0.0
    %650 = vmatpush1.msra.mxu0 %v531
    %651 = vmatprep.subr.mxu0 0.0
    %652 = vmatpush1.msra.mxu0 %v530
    %653 = vmatprep.subr.mxu0 0.0
    %654 = vmatpush1.msra.mxu0 %v529
    %655 = vmatprep.subr.mxu0 0.0
    %656 = vmatpush1.msra.mxu0 %v528
    %657 = vmatprep.subr.mxu0 0.0
    %658 = vmatpush2.msra.mxu0 0.0
    %659 = vmatprep.subr.mxu0 0.0
    %660 = vmatpush2.msra.mxu0 0.0
    %661 = vmatprep.subr.mxu0 0.0
    %662 = vmatpush2.msra.mxu0 0.0
    %663 = vmatprep.subr.mxu0 0.0
    %664 = vmatpush2.msra.mxu0 0.0
    %665 = vmatprep.subr.mxu0 0.0
    %666 = vmatpush2.msra.mxu0 0.0
    %667 = vmatprep.subr.mxu0 0.0
    %668 = vmatpush2.msra.mxu0 0.0
    %669 = vmatprep.subr.mxu0 0.0
    %670 = vmatpush2.msra.mxu0 0.0
    %671 = vmatprep.subr.mxu0 0.0
    %672 = vmatpush2.msra.mxu0 0.0
    %673 = vmatprep.subr.mxu0 0.0
    %674 = vmatpush2.msra.mxu0 0.0
    %675 = vmatprep.subr.mxu0 0.0
    %676 = vmatpush2.msra.mxu0 0.0
    %677 = vmatprep.subr.mxu0 0.0
    %678 = vmatpush2.msra.mxu0 0.0
    %679 = vmatprep.subr.mxu0 0.0
    %680 = vmatpush2.msra.mxu0 0.0
    %681 = vmatprep.subr.mxu0 0.0
    %682 = vmatpush2.msra.mxu0 0.0
    %683 = vmatprep.subr.mxu0 0.0
    %684 = vmatpush2.msra.mxu0 0.0
    %685 = vmatprep.subr.mxu0 0.0
    %686 = vmatpush2.msra.mxu0 0.0
    %687 = vmatprep.subr.mxu0 0.0
    %688 = vmatpush2.msra.mxu0 0.0
    %689 = vmatprep.mubr.f32.mxu0 0.0
    %690 = vmatmul.mubr.f32.gmra.mxu0 %v620
    %v691 = vpop.f32.mrf.mxu0
    %v692 = vadd.f32 0.0, %v691
    %v693 = vpop.f32.mrf.mxu0
    %694 = vmatprep.mubr.f32.mxu0 0.0
    %695 = vmatmul.mubr.f32.gmra.mxu0 %v623
    %v696 = vpop.f32.mrf.mxu0
    %v697 = vadd.f32 0.0, %v696
    %v698 = vpop.f32.mrf.mxu0
    %699 = vdwg.mxu0
    %s700 = scalar_lea.vmem %s2, 32
    %v701 = vld [vmem:[%s700] sm:$0xff]
    %v702 = vld [vmem:[%s700 + $0x8] sm:$0x3f]
    %v704 = vsel %vm534, %v701, 0
    %v707 = vsel %vm534, %v702, 0
    %709 = vmatprep.subr.mxu0 0.0
    %710 = vmatpush1.msra.mxu0 0.0
    %711 = vmatprep.subr.mxu0 0.0
    %712 = vmatpush1.msra.mxu0 0.0
    %713 = vmatprep.subr.mxu0 0.0
    %714 = vmatpush1.msra.mxu0 0.0
    %715 = vmatprep.subr.mxu0 0.0
    %716 = vmatpush1.msra.mxu0 0.0
    %717 = vmatprep.subr.mxu0 0.0
    %718 = vmatpush1.msra.mxu0 0.0
    %719 = vmatprep.subr.mxu0 0.0
    %720 = vmatpush1.msra.mxu0 0.0
    %721 = vmatprep.subr.mxu0 0.0
    %722 = vmatpush1.msra.mxu0 0.0
    %723 = vmatprep.subr.mxu0 0.0
    %724 = vmatpush1.msra.mxu0 0.0
    %725 = vmatprep.subr.mxu0 0.0
    %726 = vmatpush1.msra.mxu0 0.0
    %727 = vmatprep.subr.mxu0 0.0
    %728 = vmatpush1.msra.mxu0 0.0
    %729 = vmatprep.subr.mxu0 0.0
    %730 = vmatpush1.msra.mxu0 0.0
    %731 = vmatprep.subr.mxu0 0.0
    %732 = vmatpush1.msra.mxu0 0.0
    %733 = vmatprep.subr.mxu0 0.0
    %734 = vmatpush1.msra.mxu0 %v531
    %735 = vmatprep.subr.mxu0 0.0
    %736 = vmatpush1.msra.mxu0 %v530
    %737 = vmatprep.subr.mxu0 0.0
    %738 = vmatpush1.msra.mxu0 %v529
    %739 = vmatprep.subr.mxu0 0.0
    %740 = vmatpush1.msra.mxu0 %v528
    %741 = vmatprep.subr.mxu0 0.0
    %742 = vmatpush2.msra.mxu0 0.0
    %743 = vmatprep.subr.mxu0 0.0
    %744 = vmatpush2.msra.mxu0 0.0
    %745 = vmatprep.subr.mxu0 0.0
    %746 = vmatpush2.msra.mxu0 0.0
    %747 = vmatprep.subr.mxu0 0.0
    %748 = vmatpush2.msra.mxu0 0.0
    %749 = vmatprep.subr.mxu0 0.0
    %750 = vmatpush2.msra.mxu0 0.0
    %751 = vmatprep.subr.mxu0 0.0
    %752 = vmatpush2.msra.mxu0 0.0
    %753 = vmatprep.subr.mxu0 0.0
    %754 = vmatpush2.msra.mxu0 0.0
    %755 = vmatprep.subr.mxu0 0.0
    %756 = vmatpush2.msra.mxu0 0.0
    %757 = vmatprep.subr.mxu0 0.0
    %758 = vmatpush2.msra.mxu0 0.0
    %759 = vmatprep.subr.mxu0 0.0
    %760 = vmatpush2.msra.mxu0 0.0
    %761 = vmatprep.subr.mxu0 0.0
    %762 = vmatpush2.msra.mxu0 0.0
    %763 = vmatprep.subr.mxu0 0.0
    %764 = vmatpush2.msra.mxu0 0.0
    %765 = vmatprep.subr.mxu0 0.0
    %766 = vmatpush2.msra.mxu0 0.0
    %767 = vmatprep.subr.mxu0 0.0
    %768 = vmatpush2.msra.mxu0 0.0
    %769 = vmatprep.subr.mxu0 0.0
    %770 = vmatpush2.msra.mxu0 0.0
    %771 = vmatprep.subr.mxu0 0.0
    %772 = vmatpush2.msra.mxu0 0.0
    %773 = vmatprep.mubr.f32.mxu0 0.0
    %774 = vmatmul.mubr.f32.gmra.mxu0 %v704
    %v775 = vpop.f32.mrf.mxu0
    %v776 = vadd.f32 0.0, %v775
    %v777 = vpop.f32.mrf.mxu0
    %778 = vmatprep.mubr.f32.mxu0 0.0
    %779 = vmatmul.mubr.f32.gmra.mxu0 %v707
    %v780 = vpop.f32.mrf.mxu0
    %v781 = vadd.f32 0.0, %v780
    %v782 = vpop.f32.mrf.mxu0
    %783 = vdwg.mxu0
    %v784 = vmax.f32 %v608, %v692
    %v785 = vmax.f32 %v613, %v697
    %v786 = vmax.f32 %v784, %v776
    %v787 = vmax.f32 %v785, %v781
    %790 = vrot.lane.b32.xlu0 %v786, 120
    %v791 = vpop.permute.xlu0 %790
    %792 = vrot.lane.b32.xlu0 %v787, 120
    %v793 = vpop.permute.xlu0 %792
    %796 = vrot.lane.b32.xlu0 %v786, 112
    %v797 = vpop.permute.xlu0 %796
    %798 = vrot.lane.b32.xlu0 %v787, 112
    %v799 = vpop.permute.xlu0 %798
    %v802 = vmax.f32 %v786, %v791
    %v803 = vmax.f32 %v787, %v793
    %v804 = vmax.f32 %v802, %v797
    %v805 = vmax.f32 %v803, %v799
    %v806 = vtanh.pop %v804
    %v807 = vtanh.pop %v805
    %808 = vst [vmem:[#allocation7] sm:$0xff] %v806
    %809 = vst [vmem:[#allocation7 + $0x8] sm:$0x3f] %v807
    // Predicated region
    $region34: #{tpu_custom_call.1} parent=1 // pred_check
      _
    $region35: #{tpu_custom_call.1} parent=1 // pred_check_branch
      %811 = sbr.rel (0) target = $region37
    $region36: #{tpu_custom_call.1} parent=1 // pred_region
      %s813 = ssub.s32 256, 256
      %814 = vsyncadd [#allocation4], %s813
      %s815 = sshll.u32 [#allocation7], 4
      %s816 = int_to_ptr.vmem [resolvable:$true] %s815
      %821 = dma.vmem_to_hbm [thread:$0]  %s816, 256, %s6, [#allocation4], 128, 128, 8
    $region37: #{tpu_custom_call.1} parent=1 // pred_fallthru
      _
    // Predicated region
    $region38: #{tpu_custom_call.1} parent=1 // pred_check
      _
    $region39: #{tpu_custom_call.1} parent=1 // pred_check_branch
      %823 = sbr.rel (0) target = $region41
    $region40: #{tpu_custom_call.1} parent=1 // pred_region
      %824 = dma.done [#allocation4], 256
    $region41: #{tpu_custom_call.1} parent=1 // pred_fallthru
      _
    %825 = vsyncpa [#allocation3], 1
    %826 = vsyncpa [#allocation6], 1
    %827 = vsyncpa [#allocation4], 1

</llo_original>
